<compile_context>
chip_gen: v7x
topology: tpu7x:2x2x1
jax: 0.10.0
libtpu: 0.0.40
codegen_flags: <defaults>
</compile_context>

<pallas_src>
import jax
import jax.numpy as jnp
from jax.experimental import pallas as pl
from jax.experimental.pallas import tpu as pltpu


# ---------------------------------------------------------------------------
# Kernel A: BatchNorm batch statistics via on-the-fly transposed conv
# ---------------------------------------------------------------------------
def conv_stats_kernel(x_ref, w_ref, o_ref):
    # x_ref: (tm, C)   w_ref: (C, 4F)   o_ref: (2, 4F) per-tile [sum; sumsq]
    z = jnp.dot(x_ref[...], w_ref[...], preferred_element_type=jnp.float32)
    s = jnp.sum(z, axis=0, keepdims=True)
    ss = jnp.sum(z * z, axis=0, keepdims=True)
    o_ref[...] = jnp.concatenate([s, ss], axis=0)


# ---------------------------------------------------------------------------
# Kernel B: fused ConvTranspose2d(k=2,s=2) + BN(affine) + ReLU
#           (scatter of the ki/kj taps handled by the output BlockSpec)
# ---------------------------------------------------------------------------
def upconv_bn_relu_kernel(x_ref, w_ref, scale_ref, shift_ref, o_ref):
    # x_ref:    (th, W, C)     input rows for this (batch, row-block)
    # w_ref:    (C, 2F)        weight columns for this ki, ordered (kj, f)
    # scale/shift: (1, 2F)     BN affine folded with batch stats, tiled over kj
    # o_ref:    (th, 1, W, 2F) slice of the (N, H, 2, W, 2F) NHWC view (one ki)
    th, W, C = x_ref.shape
    F2 = w_ref.shape[1]
    x2d = x_ref[...].reshape(th * W, C)
    z = jnp.dot(x2d, w_ref[...], preferred_element_type=jnp.float32)
    z = jnp.maximum(z * scale_ref[...] + shift_ref[...], 0.0)
    o_ref[...] = z.reshape(th, 1, W, F2).astype(o_ref.dtype)


def _largest_divisor_at_most(n: int, cap: int) -> int:
    cap = max(1, min(n, cap))
    for d in range(cap, 0, -1):
        if n % d == 0:
            return d
    return 1


# ---------------------------------------------------------------------------
# Wrapper
# ---------------------------------------------------------------------------
def upconv2d_s2(x_nchw, weight, bias, gamma, beta, eps=1e-5):
    """Forward of UpConv2d_s2. x_nchw: (N, C, H, W) -> (N, F, 2H, 2W).

    `bias` is accepted for interface parity with nn.ConvTranspose2d but is not
    used: a per-channel constant added before training-mode BatchNorm is
    removed exactly by the mean subtraction.
    """
    del bias
    N, C, H, W = x_nchw.shape
    Cw, F, KH, KW = weight.shape
    assert (Cw, KH, KW) == (C, 2, 2)

    # ---- glue: small-tensor layout prep ------------------------------------
    x_nhwc = jnp.transpose(x_nchw, (0, 2, 3, 1))              # (N, H, W, C)
    # weight (C, f, ki, kj) -> (C, ki, kj, f) -> (C, 4F)      for stats kernel
    w4 = jnp.transpose(weight, (0, 2, 3, 1)).reshape(C, 4 * F)
    # weight -> (ki, C, kj, f) -> (2, C, 2F)                  for fused kernel
    w_ki = jnp.transpose(weight, (2, 0, 3, 1)).reshape(2, C, 2 * F)

    # ---- kernel A: BN batch statistics -------------------------------------
    M0 = N * H * W
    tm = 512                                    # large stats tile
    M0p = ((M0 + tm - 1) // tm) * tm
    x_flat = x_nhwc.reshape(M0, C)
    if M0p != M0:                               # zero rows add 0 to sum/sumsq
        x_flat = jnp.pad(x_flat, ((0, M0p - M0), (0, 0)))
    n_tiles = M0p // tm

    partials = pl.pallas_call(
        conv_stats_kernel,
        out_shape=jax.ShapeDtypeStruct((n_tiles, 2, 4 * F), jnp.float32),
        grid=(n_tiles,),
        in_specs=[
            pl.BlockSpec((tm, C), lambda i: (i, 0)),
            pl.BlockSpec((C, 4 * F), lambda i: (0, 0)),
        ],
        out_specs=pl.BlockSpec((None, 2, 4 * F), lambda i: (i, 0, 0)),
        compiler_params=pltpu.CompilerParams(dimension_semantics=("parallel",)),
    )(x_flat, w4)

    stats = partials.sum(axis=0).reshape(2, 4, F).sum(axis=1)   # (2, F)
    count = jnp.float32(4 * M0)                 # true element count per channel
    mean = stats[0] / count
    # NOTE: E[z^2] - E[z]^2 in f32 (clamped); adequate for O(1) activations.
    # Switch to a two-pass (recompute) variance if much tighter agreement is
    # ever required.
    var = jnp.maximum(stats[1] / count - mean * mean, 0.0)
    inv_std = jax.lax.rsqrt(var + eps)
    scale = gamma * inv_std
    shift = beta - mean * scale
    scale2 = jnp.tile(scale, 2).reshape(1, 2 * F)   # columns laid out as (kj, f)
    shift2 = jnp.tile(shift, 2).reshape(1, 2 * F)

    # ---- kernel B: fused conv-transpose + BN + ReLU -------------------------
    # Output allocated as (N, H, 2, W, 2F), a free reshape view of NHWC
    # (N, 2H, 2W, F):  [n, i, ki, j, kj*F + f] == [n, 2i+ki, 2j+kj, f].
    bytes_per_row = W * (C + 2 * F) * 4 * 2      # in+out blocks, double-buffered
    th = _largest_divisor_at_most(H, max(1, (2 << 20) // max(1, bytes_per_row)))

    out5 = pl.pallas_call(
        upconv_bn_relu_kernel,
        out_shape=jax.ShapeDtypeStruct((N, H, 2, W, 2 * F), jnp.float32),
        grid=(N, H // th, 2),
        in_specs=[
            pl.BlockSpec((None, th, W, C), lambda n, r, ki: (n, r, 0, 0)),
            pl.BlockSpec((None, C, 2 * F), lambda n, r, ki: (ki, 0, 0)),
            pl.BlockSpec((1, 2 * F), lambda n, r, ki: (0, 0)),
            pl.BlockSpec((1, 2 * F), lambda n, r, ki: (0, 0)),
        ],
        out_specs=pl.BlockSpec(
            (None, th, 1, W, 2 * F), lambda n, r, ki: (n, r, ki, 0, 0)
        ),
        compiler_params=pltpu.CompilerParams(
            dimension_semantics=("parallel", "parallel", "parallel")
        ),
    )(x_nhwc, w_ki, scale2, shift2)

    out_nhwc = out5.reshape(N, 2 * H, 2 * W, F)      # free view
    # final layout pass back to the module's NCHW convention (single XLA copy)
    return jnp.transpose(out_nhwc, (0, 3, 1, 2))


# ---------------------------------------------------------------------------
# Pure-JAX reference (same math, independent formulation, includes the bias)
# ---------------------------------------------------------------------------
def reference(x_nchw, weight, bias, gamma, beta, eps=1e-5):
    N, C, H, W = x_nchw.shape
    F = weight.shape[1]
    z = jnp.einsum(
        "nchw,cfkl->nfhkwl", x_nchw, weight, precision=jax.lax.Precision.HIGHEST
    )
    y = z.reshape(N, F, 2 * H, 2 * W) + bias[None, :, None, None]
    mean = jnp.mean(y, axis=(0, 2, 3), keepdims=True)
    var = jnp.mean((y - mean) ** 2, axis=(0, 2, 3), keepdims=True)
    yn = (y - mean) * jax.lax.rsqrt(var + eps)
    yn = yn * gamma[None, :, None, None] + beta[None, :, None, None]
    return jnp.maximum(yn, 0.0)


if __name__ == "__main__":
    # small shapes consistent with the module's forward
    N, C, H, W = 2, 4, 16, 16
    FEATS = 8

    key = jax.random.PRNGKey(0)
    kx, kw, kb = jax.random.split(key, 3)

    x = jax.random.normal(kx, (N, C, H, W), dtype=jnp.float32)
    # ConvTranspose2d weight shape: (in_channels, out_channels, kH, kW)
    weight = jax.random.normal(kw, (C, FEATS, 2, 2), dtype=jnp.float32) * 0.25
    bias = jax.random.normal(kb, (FEATS,), dtype=jnp.float32) * 0.1
    # BatchNorm2d default init
    gamma = jnp.ones((FEATS,), dtype=jnp.float32)
    beta = jnp.zeros((FEATS,), dtype=jnp.float32)

    out = upconv2d_s2(x, weight, bias, gamma, beta)
    out = jax.block_until_ready(out)

    ref = reference(x, weight, bias, gamma, beta)
    assert out.shape == (N, FEATS, 2 * H, 2 * W), out.shape
    assert jnp.allclose(out, ref, atol=1e-3, rtol=1e-3), float(
        jnp.max(jnp.abs(out - ref))
    )

    print("KERNEL_OK")
</pallas_src>

<mosaic_0001>
module attributes {stable_mosaic.version = 11 : i64} {
  func.func @conv_stats_kernel(%arg0: i32, %arg1: memref<512x4xf32, #tpu.memory_space<vmem>>, %arg2: memref<4x32xf32, #tpu.memory_space<vmem>>, %arg3: memref<1x2x32xf32, #tpu.memory_space<vmem>>) attributes {dimension_semantics = [#tpu.dimension_semantics<parallel>], iteration_bounds = array<i64: 1>, scalar_prefetch = 0 : i64, scratch_operands = 0 : i64, tpu.core_type = #tpu.core_type<tc>, window_params = [{transform_indices = @transform_0, window_bounds = array<i64: 512, 4>}, {pipeline_mode = #tpu.pipeline_mode<synchronous>, transform_indices = @transform_1, window_bounds = array<i64: 4, 32>}, {transform_indices = @transform_2, window_bounds = array<i64: 1, 2, 32>}]} {
    %c0 = arith.constant 0 : index
    %c0_0 = arith.constant 0 : index
    %0 = vector.load %arg1[%c0, %c0_0] : memref<512x4xf32, #tpu.memory_space<vmem>>, vector<512x4xf32>
    %c0_1 = arith.constant 0 : index
    %c0_2 = arith.constant 0 : index
    %1 = vector.load %arg2[%c0_1, %c0_2] : memref<4x32xf32, #tpu.memory_space<vmem>>, vector<4x32xf32>
    %cst = arith.constant dense<0.000000e+00> : vector<512x32xf32>
    %2 = tpu.matmul %0, %1, %cst {dimension_numbers = #tpu.dot_dimension_numbers<[1], [0], [0], [1], [0, 0, 1, 1], [], []>} : vector<512x4xf32>, vector<4x32xf32>, vector<512x32xf32> -> vector<512x32xf32>
    %cst_3 = arith.constant dense<0.000000e+00> : vector<32xf32>
    %3 = vector.multi_reduction <add>, %2, %cst_3 [0] : vector<512x32xf32> to vector<32xf32>
    %4 = vector.shape_cast %3 : vector<32xf32> to vector<1x32xf32>
    %5 = arith.mulf %2, %2 : vector<512x32xf32>
    %cst_4 = arith.constant dense<0.000000e+00> : vector<32xf32>
    %6 = vector.multi_reduction <add>, %5, %cst_4 [0] : vector<512x32xf32> to vector<32xf32>
    %7 = vector.shape_cast %6 : vector<32xf32> to vector<1x32xf32>
    %8 = tpu.concatenate %4, %7 in 0 : vector<1x32xf32>, vector<1x32xf32> -> vector<2x32xf32>
    %c0_5 = arith.constant 0 : index
    %c0_6 = arith.constant 0 : index
    %c0_7 = arith.constant 0 : index
    %9 = vector.load %arg3[%c0_5, %c0_6, %c0_7] : memref<1x2x32xf32, #tpu.memory_space<vmem>>, vector<1x2x32xf32>
    %10 = vector.shape_cast %9 : vector<1x2x32xf32> to vector<2x32xf32>
    %11 = vector.shape_cast %8 : vector<2x32xf32> to vector<1x2x32xf32>
    tpu.vector_store %arg3[%c0_5, %c0_6, %c0_7], %11 {strides = array<i32>} : memref<1x2x32xf32, #tpu.memory_space<vmem>>, vector<1x2x32xf32>,
    return
  }
  func.func @transform_0(%arg0: i32) -> (i32, i32) {
    %c0_i32 = arith.constant 0 : i32
    %c0_i32_0 = arith.constant 0 : i32
    return %arg0, %c0_i32 : i32, i32
  }
  func.func @transform_1(%arg0: i32) -> (i32, i32) {
    %c0_i32 = arith.constant 0 : i32
    %c0_i32_0 = arith.constant 0 : i32
    %c0_i32_1 = arith.constant 0 : i32
    return %c0_i32, %c0_i32_0 : i32, i32
  }
  func.func @transform_2(%arg0: i32) -> (i32, i32, i32) {
    %c0_i32 = arith.constant 0 : i32
    %c0_i32_0 = arith.constant 0 : i32
    %c0_i32_1 = arith.constant 0 : i32
    return %arg0, %c0_i32, %c0_i32_0 : i32, i32, i32
  }
}

</mosaic_0001>

<llo_original>
// kernel: tpu_custom_call.1
$region0: #{tpu_custom_call.1}
  #allocation0 [shape = 'u32[]', space=smem, size = 0x4, offset = 0x4, fixed_abs, tag = 'smem constant byte address 0x4 - core index']
  #allocation1 [shape = 'u32[144,128]{1,0:T(1,128)}', space=vmem, size = 0x12000, scoped, tag = 'internal scratch']
  %s0 = inlined_call_operand.vmem [shape: f32[512,4], index: 0, kind: input, shape index: {}]
  %s1 = inlined_call_operand.vmem [shape: f32[4,32], index: 1, kind: input, shape index: {}]
  %s2 = inlined_call_operand.hbm [shape: f32[1,2,32], index: 2, kind: output, shape index: {}]
  %s3 = sld [smem:[#allocation0]]
  $region18: #{tpu_custom_call.1} parent=0
    _
  %s5 = ssub.s32 1, %s3
  %s6 = scalar_select 0, %s5, %s3
  $region1: #{tpu_custom_call.1} parent=0
    #allocation2 [shape = 'u8[1024]{0}', space=vmem, size = 0x400, scoped, tag = 'output window, operand 0, single buffered']
    #allocation3 [shape = 's32[1]{0}', space=sflag, size = 0x4, scoped, tag = 'scoped memory for tpu_custom_call.1']
    %7 = vsyncpa [#allocation3], 0
    // Predicated region
    $region2: #{tpu_custom_call.1} parent=1 // pred_check
      _
    $region3: #{tpu_custom_call.1} parent=1 // pred_check_branch
      %9 = sbr.rel (0) target = $region5
    $region4: #{tpu_custom_call.1} parent=1 // pred_region
      _
    $region5: #{tpu_custom_call.1} parent=1 // pred_fallthru
      _
    // Predicated region
    $region6: #{tpu_custom_call.1} parent=1 // pred_check
      _
    $region7: #{tpu_custom_call.1} parent=1 // pred_check_branch
      %11 = sbr.rel (0) target = $region9
    $region8: #{tpu_custom_call.1} parent=1 // pred_region
      _
    $region9: #{tpu_custom_call.1} parent=1 // pred_fallthru
      _
    %v12 = vld [vmem:[%s0] sm:$0xff]
    %v13 = vld [vmem:[%s0 + $0x8] sm:$0xff]
    %v14 = vld [vmem:[%s0 + $0x10] sm:$0xff]
    %v15 = vld [vmem:[%s0 + $0x18] sm:$0xff]
    %v16 = vld [vmem:[%s0 + $0x20] sm:$0xff]
    %v17 = vld [vmem:[%s0 + $0x28] sm:$0xff]
    %v18 = vld [vmem:[%s0 + $0x30] sm:$0xff]
    %v19 = vld [vmem:[%s0 + $0x38] sm:$0xff]
    %v20 = vld [vmem:[%s0 + $0x40] sm:$0xff]
    %v21 = vld [vmem:[%s0 + $0x48] sm:$0xff]
    %v22 = vld [vmem:[%s0 + $0x50] sm:$0xff]
    %v23 = vld [vmem:[%s0 + $0x58] sm:$0xff]
    %v24 = vld [vmem:[%s0 + $0x60] sm:$0xff]
    %v25 = vld [vmem:[%s0 + $0x68] sm:$0xff]
    %v26 = vld [vmem:[%s0 + $0x70] sm:$0xff]
    %v27 = vld [vmem:[%s0 + $0x78] sm:$0xff]
    %v28 = vld [vmem:[%s0 + $0x80] sm:$0xff]
    %v29 = vld [vmem:[%s0 + $0x88] sm:$0xff]
    %v30 = vld [vmem:[%s0 + $0x90] sm:$0xff]
    %v31 = vld [vmem:[%s0 + $0x98] sm:$0xff]
    %v32 = vld [vmem:[%s0 + $0xa0] sm:$0xff]
    %v33 = vld [vmem:[%s0 + $0xa8] sm:$0xff]
    %v34 = vld [vmem:[%s0 + $0xb0] sm:$0xff]
    %v35 = vld [vmem:[%s0 + $0xb8] sm:$0xff]
    %v36 = vld [vmem:[%s0 + $0xc0] sm:$0xff]
    %v37 = vld [vmem:[%s0 + $0xc8] sm:$0xff]
    %v38 = vld [vmem:[%s0 + $0xd0] sm:$0xff]
    %v39 = vld [vmem:[%s0 + $0xd8] sm:$0xff]
    %v40 = vld [vmem:[%s0 + $0xe0] sm:$0xff]
    %v41 = vld [vmem:[%s0 + $0xe8] sm:$0xff]
    %v42 = vld [vmem:[%s0 + $0xf0] sm:$0xff]
    %v43 = vld [vmem:[%s0 + $0xf8] sm:$0xff]
    %v44 = vld [vmem:[%s0 + $0x100] sm:$0xff]
    %v45 = vld [vmem:[%s0 + $0x108] sm:$0xff]
    %v46 = vld [vmem:[%s0 + $0x110] sm:$0xff]
    %v47 = vld [vmem:[%s0 + $0x118] sm:$0xff]
    %v48 = vld [vmem:[%s0 + $0x120] sm:$0xff]
    %v49 = vld [vmem:[%s0 + $0x128] sm:$0xff]
    %v50 = vld [vmem:[%s0 + $0x130] sm:$0xff]
    %v51 = vld [vmem:[%s0 + $0x138] sm:$0xff]
    %v52 = vld [vmem:[%s0 + $0x140] sm:$0xff]
    %v53 = vld [vmem:[%s0 + $0x148] sm:$0xff]
    %v54 = vld [vmem:[%s0 + $0x150] sm:$0xff]
    %v55 = vld [vmem:[%s0 + $0x158] sm:$0xff]
    %v56 = vld [vmem:[%s0 + $0x160] sm:$0xff]
    %v57 = vld [vmem:[%s0 + $0x168] sm:$0xff]
    %v58 = vld [vmem:[%s0 + $0x170] sm:$0xff]
    %v59 = vld [vmem:[%s0 + $0x178] sm:$0xff]
    %v60 = vld [vmem:[%s0 + $0x180] sm:$0xff]
    %v61 = vld [vmem:[%s0 + $0x188] sm:$0xff]
    %v62 = vld [vmem:[%s0 + $0x190] sm:$0xff]
    %v63 = vld [vmem:[%s0 + $0x198] sm:$0xff]
    %v64 = vld [vmem:[%s0 + $0x1a0] sm:$0xff]
    %v65 = vld [vmem:[%s0 + $0x1a8] sm:$0xff]
    %v66 = vld [vmem:[%s0 + $0x1b0] sm:$0xff]
    %v67 = vld [vmem:[%s0 + $0x1b8] sm:$0xff]
    %v68 = vld [vmem:[%s0 + $0x1c0] sm:$0xff]
    %v69 = vld [vmem:[%s0 + $0x1c8] sm:$0xff]
    %v70 = vld [vmem:[%s0 + $0x1d0] sm:$0xff]
    %v71 = vld [vmem:[%s0 + $0x1d8] sm:$0xff]
    %v72 = vld [vmem:[%s0 + $0x1e0] sm:$0xff]
    %v73 = vld [vmem:[%s0 + $0x1e8] sm:$0xff]
    %v74 = vld [vmem:[%s0 + $0x1f0] sm:$0xff]
    %v75 = vld [vmem:[%s0 + $0x1f8] sm:$0xff]
    %v76 = vld [vmem:[%s1] sm:$0xf]
    %vm77 = vcmask 31744
    %v79 = vsel %vm77, %v12, 0
    %v82 = vsel %vm77, %v13, 0
    %v85 = vsel %vm77, %v14, 0
    %v88 = vsel %vm77, %v15, 0
    %v91 = vsel %vm77, %v16, 0
    %v94 = vsel %vm77, %v17, 0
    %v97 = vsel %vm77, %v18, 0
    %v100 = vsel %vm77, %v19, 0
    %v103 = vsel %vm77, %v20, 0
    %v106 = vsel %vm77, %v21, 0
    %v109 = vsel %vm77, %v22, 0
    %v112 = vsel %vm77, %v23, 0
    %v115 = vsel %vm77, %v24, 0
    %v118 = vsel %vm77, %v25, 0
    %v121 = vsel %vm77, %v26, 0
    %v124 = vsel %vm77, %v27, 0
    %v127 = vsel %vm77, %v28, 0
    %v130 = vsel %vm77, %v29, 0
    %v133 = vsel %vm77, %v30, 0
    %v136 = vsel %vm77, %v31, 0
    %v139 = vsel %vm77, %v32, 0
    %v142 = vsel %vm77, %v33, 0
    %v145 = vsel %vm77, %v34, 0
    %v148 = vsel %vm77, %v35, 0
    %v151 = vsel %vm77, %v36, 0
    %v154 = vsel %vm77, %v37, 0
    %v157 = vsel %vm77, %v38, 0
    %v160 = vsel %vm77, %v39, 0
    %v163 = vsel %vm77, %v40, 0
    %v166 = vsel %vm77, %v41, 0
    %v169 = vsel %vm77, %v42, 0
    %v172 = vsel %vm77, %v43, 0
    %v175 = vsel %vm77, %v44, 0
    %v178 = vsel %vm77, %v45, 0
    %v181 = vsel %vm77, %v46, 0
    %v184 = vsel %vm77, %v47, 0
    %v187 = vsel %vm77, %v48, 0
    %v190 = vsel %vm77, %v49, 0
    %v193 = vsel %vm77, %v50, 0
    %v196 = vsel %vm77, %v51, 0
    %v199 = vsel %vm77, %v52, 0
    %v202 = vsel %vm77, %v53, 0
    %v205 = vsel %vm77, %v54, 0
    %v208 = vsel %vm77, %v55, 0
    %v211 = vsel %vm77, %v56, 0
    %v214 = vsel %vm77, %v57, 0
    %v217 = vsel %vm77, %v58, 0
    %v220 = vsel %vm77, %v59, 0
    %v223 = vsel %vm77, %v60, 0
    %v226 = vsel %vm77, %v61, 0
    %v229 = vsel %vm77, %v62, 0
    %v232 = vsel %vm77, %v63, 0
    %v235 = vsel %vm77, %v64, 0
    %v238 = vsel %vm77, %v65, 0
    %v241 = vsel %vm77, %v66, 0
    %v244 = vsel %vm77, %v67, 0
    %v247 = vsel %vm77, %v68, 0
    %v250 = vsel %vm77, %v69, 0
    %v253 = vsel %vm77, %v70, 0
    %v256 = vsel %vm77, %v71, 0
    %v259 = vsel %vm77, %v72, 0
    %v262 = vsel %vm77, %v73, 0
    %v265 = vsel %vm77, %v74, 0
    %v268 = vsel %vm77, %v75, 0
    %vm270 = vcmask 1043456
    %v272 = vsel %vm270, %v76, 0
    %274 = vmatprep.subr.mxu0 0.0
    %275 = vmatpush1.msra.mxu0 %v272
    %276 = vmatprep.subr.mxu0 0.0
    %277 = vmatpush1.msra.mxu0 0.0
    %278 = vmatprep.subr.mxu0 0.0
    %279 = vmatpush1.msra.mxu0 0.0
    %280 = vmatprep.subr.mxu0 0.0
    %281 = vmatpush1.msra.mxu0 0.0
    %282 = vmatprep.subr.mxu0 0.0
    %283 = vmatpush1.msra.mxu0 0.0
    %284 = vmatprep.subr.mxu0 0.0
    %285 = vmatpush1.msra.mxu0 0.0
    %286 = vmatprep.subr.mxu0 0.0
    %287 = vmatpush1.msra.mxu0 0.0
    %288 = vmatprep.subr.mxu0 0.0
    %289 = vmatpush1.msra.mxu0 0.0
    %290 = vmatprep.subr.mxu0 0.0
    %291 = vmatpush1.msra.mxu0 0.0
    %292 = vmatprep.subr.mxu0 0.0
    %293 = vmatpush1.msra.mxu0 0.0
    %294 = vmatprep.subr.mxu0 0.0
    %295 = vmatpush1.msra.mxu0 0.0
    %296 = vmatprep.subr.mxu0 0.0
    %297 = vmatpush1.msra.mxu0 0.0
    %298 = vmatprep.subr.mxu0 0.0
    %299 = vmatpush1.msra.mxu0 0.0
    %300 = vmatprep.subr.mxu0 0.0
    %301 = vmatpush1.msra.mxu0 0.0
    %302 = vmatprep.subr.mxu0 0.0
    %303 = vmatpush1.msra.mxu0 0.0
    %304 = vmatprep.subr.mxu0 0.0
    %305 = vmatpush1.msra.mxu0 0.0
    %306 = vmatprep.subr.mxu0 0.0
    %307 = vmatpush1.msra.mxu0 0.0
    %308 = vmatprep.subr.mxu0 0.0
    %309 = vmatpush1.msra.mxu0 0.0
    %310 = vmatprep.subr.mxu0 0.0
    %311 = vmatpush1.msra.mxu0 0.0
    %312 = vmatprep.subr.mxu0 0.0
    %313 = vmatpush1.msra.mxu0 0.0
    %314 = vmatprep.subr.mxu0 0.0
    %315 = vmatpush1.msra.mxu0 0.0
    %316 = vmatprep.subr.mxu0 0.0
    %317 = vmatpush1.msra.mxu0 0.0
    %318 = vmatprep.subr.mxu0 0.0
    %319 = vmatpush1.msra.mxu0 0.0
    %320 = vmatprep.subr.mxu0 0.0
    %321 = vmatpush1.msra.mxu0 0.0
    %322 = vmatprep.subr.mxu0 0.0
    %323 = vmatpush1.msra.mxu0 0.0
    %324 = vmatprep.subr.mxu0 0.0
    %325 = vmatpush1.msra.mxu0 0.0
    %326 = vmatprep.subr.mxu0 0.0
    %327 = vmatpush1.msra.mxu0 0.0
    %328 = vmatprep.subr.mxu0 0.0
    %329 = vmatpush1.msra.mxu0 0.0
    %330 = vmatprep.subr.mxu0 0.0
    %331 = vmatpush1.msra.mxu0 0.0
    %332 = vmatprep.subr.mxu0 0.0
    %333 = vmatpush1.msra.mxu0 0.0
    %334 = vmatprep.subr.mxu0 0.0
    %335 = vmatpush1.msra.mxu0 0.0
    %336 = vmatprep.subr.mxu0 0.0
    %337 = vmatpush1.msra.mxu0 0.0
    %338 = vmatprep.mubr.f32.mxu0 0.0
    %339 = vmatmul.mubr.f32.gmra.mrb[0].mxu0 %v79
    %v340 = vpop.f32.mrb[0].mxu0
    %v341 = vadd.f32 0.0, %v340
    %v342 = vpop.f32.mrb[0].mxu0
    %343 = vmatprep.mubr.f32.mxu0 0.0
    %344 = vmatmul.mubr.f32.gmra.mrb[0].mxu0 %v82
    %v345 = vpop.f32.mrb[0].mxu0
    %v346 = vadd.f32 0.0, %v345
    %v347 = vpop.f32.mrb[0].mxu0
    %348 = vmatprep.mubr.f32.mxu0 0.0
    %349 = vmatmul.mubr.f32.gmra.mrb[0].mxu0 %v85
    %v350 = vpop.f32.mrb[0].mxu0
    %v351 = vadd.f32 0.0, %v350
    %v352 = vpop.f32.mrb[0].mxu0
    %353 = vmatprep.mubr.f32.mxu0 0.0
    %354 = vmatmul.mubr.f32.gmra.mrb[0].mxu0 %v88
    %v355 = vpop.f32.mrb[0].mxu0
    %v356 = vadd.f32 0.0, %v355
    %v357 = vpop.f32.mrb[0].mxu0
    %358 = vmatprep.mubr.f32.mxu0 0.0
    %359 = vmatmul.mubr.f32.gmra.mrb[0].mxu0 %v91
    %v360 = vpop.f32.mrb[0].mxu0
    %v361 = vadd.f32 0.0, %v360
    %v362 = vpop.f32.mrb[0].mxu0
    %363 = vmatprep.mubr.f32.mxu0 0.0
    %364 = vmatmul.mubr.f32.gmra.mrb[0].mxu0 %v94
    %v365 = vpop.f32.mrb[0].mxu0
    %v366 = vadd.f32 0.0, %v365
    %v367 = vpop.f32.mrb[0].mxu0
    %368 = vmatprep.mubr.f32.mxu0 0.0
    %369 = vmatmul.mubr.f32.gmra.mrb[0].mxu0 %v97
    %v370 = vpop.f32.mrb[0].mxu0
    %v371 = vadd.f32 0.0, %v370
    %v372 = vpop.f32.mrb[0].mxu0
    %373 = vmatprep.mubr.f32.mxu0 0.0
    %374 = vmatmul.mubr.f32.gmra.mrb[0].mxu0 %v100
    %v375 = vpop.f32.mrb[0].mxu0
    %v376 = vadd.f32 0.0, %v375
    %v377 = vpop.f32.mrb[0].mxu0
    %378 = vmatprep.mubr.f32.mxu0 0.0
    %379 = vmatmul.mubr.f32.gmra.mrb[0].mxu0 %v103
    %v380 = vpop.f32.mrb[0].mxu0
    %v381 = vadd.f32 0.0, %v380
    %v382 = vpop.f32.mrb[0].mxu0
    %383 = vmatprep.mubr.f32.mxu0 0.0
    %384 = vmatmul.mubr.f32.gmra.mrb[0].mxu0 %v106
    %v385 = vpop.f32.mrb[0].mxu0
    %v386 = vadd.f32 0.0, %v385
    %v387 = vpop.f32.mrb[0].mxu0
    %388 = vmatprep.mubr.f32.mxu0 0.0
    %389 = vmatmul.mubr.f32.gmra.mrb[0].mxu0 %v109
    %v390 = vpop.f32.mrb[0].mxu0
    %v391 = vadd.f32 0.0, %v390
    %v392 = vpop.f32.mrb[0].mxu0
    %393 = vmatprep.mubr.f32.mxu0 0.0
    %394 = vmatmul.mubr.f32.gmra.mrb[0].mxu0 %v112
    %v395 = vpop.f32.mrb[0].mxu0
    %v396 = vadd.f32 0.0, %v395
    %v397 = vpop.f32.mrb[0].mxu0
    %398 = vmatprep.mubr.f32.mxu0 0.0
    %399 = vmatmul.mubr.f32.gmra.mrb[0].mxu0 %v115
    %v400 = vpop.f32.mrb[0].mxu0
    %v401 = vadd.f32 0.0, %v400
    %v402 = vpop.f32.mrb[0].mxu0
    %403 = vmatprep.mubr.f32.mxu0 0.0
    %404 = vmatmul.mubr.f32.gmra.mrb[0].mxu0 %v118
    %v405 = vpop.f32.mrb[0].mxu0
    %v406 = vadd.f32 0.0, %v405
    %v407 = vpop.f32.mrb[0].mxu0
    %408 = vmatprep.mubr.f32.mxu0 0.0
    %409 = vmatmul.mubr.f32.gmra.mrb[0].mxu0 %v121
    %v410 = vpop.f32.mrb[0].mxu0
    %v411 = vadd.f32 0.0, %v410
    %v412 = vpop.f32.mrb[0].mxu0
    %413 = vmatprep.mubr.f32.mxu0 0.0
    %414 = vmatmul.mubr.f32.gmra.mrb[0].mxu0 %v124
    %v415 = vpop.f32.mrb[0].mxu0
    %v416 = vadd.f32 0.0, %v415
    %v417 = vpop.f32.mrb[0].mxu0
    %418 = vmatprep.mubr.f32.mxu0 0.0
    %419 = vmatmul.mubr.f32.gmra.mrb[0].mxu0 %v127
    %v420 = vpop.f32.mrb[0].mxu0
    %v421 = vadd.f32 0.0, %v420
    %v422 = vpop.f32.mrb[0].mxu0
    %423 = vmatprep.mubr.f32.mxu0 0.0
    %424 = vmatmul.mubr.f32.gmra.mrb[0].mxu0 %v130
    %v425 = vpop.f32.mrb[0].mxu0
    %v426 = vadd.f32 0.0, %v425
    %v427 = vpop.f32.mrb[0].mxu0
    %428 = vmatprep.mubr.f32.mxu0 0.0
    %429 = vmatmul.mubr.f32.gmra.mrb[0].mxu0 %v133
    %v430 = vpop.f32.mrb[0].mxu0
    %v431 = vadd.f32 0.0, %v430
    %v432 = vpop.f32.mrb[0].mxu0
    %433 = vmatprep.mubr.f32.mxu0 0.0
    %434 = vmatmul.mubr.f32.gmra.mrb[0].mxu0 %v136
    %v435 = vpop.f32.mrb[0].mxu0
    %v436 = vadd.f32 0.0, %v435
    %v437 = vpop.f32.mrb[0].mxu0
    %438 = vmatprep.mubr.f32.mxu0 0.0
    %439 = vmatmul.mubr.f32.gmra.mrb[0].mxu0 %v139
    %v440 = vpop.f32.mrb[0].mxu0
    %v441 = vadd.f32 0.0, %v440
    %v442 = vpop.f32.mrb[0].mxu0
    %443 = vmatprep.mubr.f32.mxu0 0.0
    %444 = vmatmul.mubr.f32.gmra.mrb[0].mxu0 %v142
    %v445 = vpop.f32.mrb[0].mxu0
    %v446 = vadd.f32 0.0, %v445
    %v447 = vpop.f32.mrb[0].mxu0
    %448 = vmatprep.mubr.f32.mxu0 0.0
    %449 = vmatmul.mubr.f32.gmra.mrb[0].mxu0 %v145
    %v450 = vpop.f32.mrb[0].mxu0
    %v451 = vadd.f32 0.0, %v450
    %v452 = vpop.f32.mrb[0].mxu0
    %453 = vmatprep.mubr.f32.mxu0 0.0
    %454 = vmatmul.mubr.f32.gmra.mrb[0].mxu0 %v148
    %v455 = vpop.f32.mrb[0].mxu0
    %v456 = vadd.f32 0.0, %v455
    %v457 = vpop.f32.mrb[0].mxu0
    %458 = vmatprep.mubr.f32.mxu0 0.0
    %459 = vmatmul.mubr.f32.gmra.mrb[0].mxu0 %v151
    %v460 = vpop.f32.mrb[0].mxu0
    %v461 = vadd.f32 0.0, %v460
    %v462 = vpop.f32.mrb[0].mxu0
    %463 = vmatprep.mubr.f32.mxu0 0.0
    %464 = vmatmul.mubr.f32.gmra.mrb[0].mxu0 %v154
    %v465 = vpop.f32.mrb[0].mxu0
    %v466 = vadd.f32 0.0, %v465
    %v467 = vpop.f32.mrb[0].mxu0
    %468 = vmatprep.mubr.f32.mxu0 0.0
    %469 = vmatmul.mubr.f32.gmra.mrb[0].mxu0 %v157
    %v470 = vpop.f32.mrb[0].mxu0
    %v471 = vadd.f32 0.0, %v470
    %v472 = vpop.f32.mrb[0].mxu0
    %473 = vmatprep.mubr.f32.mxu0 0.0
    %474 = vmatmul.mubr.f32.gmra.mrb[0].mxu0 %v160
    %v475 = vpop.f32.mrb[0].mxu0
    %v476 = vadd.f32 0.0, %v475
    %v477 = vpop.f32.mrb[0].mxu0
    %478 = vmatprep.mubr.f32.mxu0 0.0
    %479 = vmatmul.mubr.f32.gmra.mrb[0].mxu0 %v163
    %v480 = vpop.f32.mrb[0].mxu0
    %v481 = vadd.f32 0.0, %v480
    %v482 = vpop.f32.mrb[0].mxu0
    %483 = vmatprep.mubr.f32.mxu0 0.0
    %484 = vmatmul.mubr.f32.gmra.mrb[0].mxu0 %v166
    %v485 = vpop.f32.mrb[0].mxu0
    %v486 = vadd.f32 0.0, %v485
    %v487 = vpop.f32.mrb[0].mxu0
    %488 = vmatprep.mubr.f32.mxu0 0.0
    %489 = vmatmul.mubr.f32.gmra.mrb[0].mxu0 %v169
    %v490 = vpop.f32.mrb[0].mxu0
    %v491 = vadd.f32 0.0, %v490
    %v492 = vpop.f32.mrb[0].mxu0
    %493 = vmatprep.mubr.f32.mxu0 0.0
    %494 = vmatmul.mubr.f32.gmra.mrb[0].mxu0 %v172
    %v495 = vpop.f32.mrb[0].mxu0
    %v496 = vadd.f32 0.0, %v495
    %v497 = vpop.f32.mrb[0].mxu0
    %498 = vmatprep.mubr.f32.mxu0 0.0
    %499 = vmatmul.mubr.f32.gmra.mrb[0].mxu0 %v175
    %v500 = vpop.f32.mrb[0].mxu0
    %v501 = vadd.f32 0.0, %v500
    %v502 = vpop.f32.mrb[0].mxu0
    %503 = vmatprep.mubr.f32.mxu0 0.0
    %504 = vmatmul.mubr.f32.gmra.mrb[0].mxu0 %v178
    %v505 = vpop.f32.mrb[0].mxu0
    %v506 = vadd.f32 0.0, %v505
    %v507 = vpop.f32.mrb[0].mxu0
    %508 = vmatprep.mubr.f32.mxu0 0.0
    %509 = vmatmul.mubr.f32.gmra.mrb[0].mxu0 %v181
    %v510 = vpop.f32.mrb[0].mxu0
    %v511 = vadd.f32 0.0, %v510
    %v512 = vpop.f32.mrb[0].mxu0
    %513 = vmatprep.mubr.f32.mxu0 0.0
    %514 = vmatmul.mubr.f32.gmra.mrb[0].mxu0 %v184
    %v515 = vpop.f32.mrb[0].mxu0
    %v516 = vadd.f32 0.0, %v515
    %v517 = vpop.f32.mrb[0].mxu0
    %518 = vmatprep.mubr.f32.mxu0 0.0
    %519 = vmatmul.mubr.f32.gmra.mrb[0].mxu0 %v187
    %v520 = vpop.f32.mrb[0].mxu0
    %v521 = vadd.f32 0.0, %v520
    %v522 = vpop.f32.mrb[0].mxu0
    %523 = vmatprep.mubr.f32.mxu0 0.0
    %524 = vmatmul.mubr.f32.gmra.mrb[0].mxu0 %v190
    %v525 = vpop.f32.mrb[0].mxu0
    %v526 = vadd.f32 0.0, %v525
    %v527 = vpop.f32.mrb[0].mxu0
    %528 = vmatprep.mubr.f32.mxu0 0.0
    %529 = vmatmul.mubr.f32.gmra.mrb[0].mxu0 %v193
    %v530 = vpop.f32.mrb[0].mxu0
    %v531 = vadd.f32 0.0, %v530
    %v532 = vpop.f32.mrb[0].mxu0
    %533 = vmatprep.mubr.f32.mxu0 0.0
    %534 = vmatmul.mubr.f32.gmra.mrb[0].mxu0 %v196
    %v535 = vpop.f32.mrb[0].mxu0
    %v536 = vadd.f32 0.0, %v535
    %v537 = vpop.f32.mrb[0].mxu0
    %538 = vmatprep.mubr.f32.mxu0 0.0
    %539 = vmatmul.mubr.f32.gmra.mrb[0].mxu0 %v199
    %v540 = vpop.f32.mrb[0].mxu0
    %v541 = vadd.f32 0.0, %v540
    %v542 = vpop.f32.mrb[0].mxu0
    %543 = vmatprep.mubr.f32.mxu0 0.0
    %544 = vmatmul.mubr.f32.gmra.mrb[0].mxu0 %v202
    %v545 = vpop.f32.mrb[0].mxu0
    %v546 = vadd.f32 0.0, %v545
    %v547 = vpop.f32.mrb[0].mxu0
    %548 = vmatprep.mubr.f32.mxu0 0.0
    %549 = vmatmul.mubr.f32.gmra.mrb[0].mxu0 %v205
    %v550 = vpop.f32.mrb[0].mxu0
    %v551 = vadd.f32 0.0, %v550
    %v552 = vpop.f32.mrb[0].mxu0
    %553 = vmatprep.mubr.f32.mxu0 0.0
    %554 = vmatmul.mubr.f32.gmra.mrb[0].mxu0 %v208
    %v555 = vpop.f32.mrb[0].mxu0
    %v556 = vadd.f32 0.0, %v555
    %v557 = vpop.f32.mrb[0].mxu0
    %558 = vmatprep.mubr.f32.mxu0 0.0
    %559 = vmatmul.mubr.f32.gmra.mrb[0].mxu0 %v211
    %v560 = vpop.f32.mrb[0].mxu0
    %v561 = vadd.f32 0.0, %v560
    %v562 = vpop.f32.mrb[0].mxu0
    %563 = vmatprep.mubr.f32.mxu0 0.0
    %564 = vmatmul.mubr.f32.gmra.mrb[0].mxu0 %v214
    %v565 = vpop.f32.mrb[0].mxu0
    %v566 = vadd.f32 0.0, %v565
    %v567 = vpop.f32.mrb[0].mxu0
    %568 = vmatprep.mubr.f32.mxu0 0.0
    %569 = vmatmul.mubr.f32.gmra.mrb[0].mxu0 %v217
    %v570 = vpop.f32.mrb[0].mxu0
    %v571 = vadd.f32 0.0, %v570
    %v572 = vpop.f32.mrb[0].mxu0
    %573 = vmatprep.mubr.f32.mxu0 0.0
    %574 = vmatmul.mubr.f32.gmra.mrb[0].mxu0 %v220
    %v575 = vpop.f32.mrb[0].mxu0
    %v576 = vadd.f32 0.0, %v575
    %v577 = vpop.f32.mrb[0].mxu0
    %578 = vmatprep.mubr.f32.mxu0 0.0
    %579 = vmatmul.mubr.f32.gmra.mrb[0].mxu0 %v223
    %v580 = vpop.f32.mrb[0].mxu0
    %v581 = vadd.f32 0.0, %v580
    %v582 = vpop.f32.mrb[0].mxu0
    %583 = vmatprep.mubr.f32.mxu0 0.0
    %584 = vmatmul.mubr.f32.gmra.mrb[0].mxu0 %v226
    %v585 = vpop.f32.mrb[0].mxu0
    %v586 = vadd.f32 0.0, %v585
    %v587 = vpop.f32.mrb[0].mxu0
    %588 = vmatprep.mubr.f32.mxu0 0.0
    %589 = vmatmul.mubr.f32.gmra.mrb[0].mxu0 %v229
    %v590 = vpop.f32.mrb[0].mxu0
    %v591 = vadd.f32 0.0, %v590
    %v592 = vpop.f32.mrb[0].mxu0
    %593 = vmatprep.mubr.f32.mxu0 0.0
    %594 = vmatmul.mubr.f32.gmra.mrb[0].mxu0 %v232
    %v595 = vpop.f32.mrb[0].mxu0
    %v596 = vadd.f32 0.0, %v595
    %v597 = vpop.f32.mrb[0].mxu0
    %598 = vmatprep.mubr.f32.mxu0 0.0
    %599 = vmatmul.mubr.f32.gmra.mrb[0].mxu0 %v235
    %v600 = vpop.f32.mrb[0].mxu0
    %v601 = vadd.f32 0.0, %v600
    %v602 = vpop.f32.mrb[0].mxu0
    %603 = vmatprep.mubr.f32.mxu0 0.0
    %604 = vmatmul.mubr.f32.gmra.mrb[0].mxu0 %v238
    %v605 = vpop.f32.mrb[0].mxu0
    %v606 = vadd.f32 0.0, %v605
    %v607 = vpop.f32.mrb[0].mxu0
    %608 = vmatprep.mubr.f32.mxu0 0.0
    %609 = vmatmul.mubr.f32.gmra.mrb[0].mxu0 %v241
    %v610 = vpop.f32.mrb[0].mxu0
    %v611 = vadd.f32 0.0, %v610
    %v612 = vpop.f32.mrb[0].mxu0
    %613 = vmatprep.mubr.f32.mxu0 0.0
    %614 = vmatmul.mubr.f32.gmra.mrb[0].mxu0 %v244
    %v615 = vpop.f32.mrb[0].mxu0
    %v616 = vadd.f32 0.0, %v615
    %v617 = vpop.f32.mrb[0].mxu0
    %618 = vmatprep.mubr.f32.mxu0 0.0
    %619 = vmatmul.mubr.f32.gmra.mrb[0].mxu0 %v247
    %v620 = vpop.f32.mrb[0].mxu0
    %v621 = vadd.f32 0.0, %v620
    %v622 = vpop.f32.mrb[0].mxu0
    %623 = vmatprep.mubr.f32.mxu0 0.0
    %624 = vmatmul.mubr.f32.gmra.mrb[0].mxu0 %v250
    %v625 = vpop.f32.mrb[0].mxu0
    %v626 = vadd.f32 0.0, %v625
    %v627 = vpop.f32.mrb[0].mxu0
    %628 = vmatprep.mubr.f32.mxu0 0.0
    %629 = vmatmul.mubr.f32.gmra.mrb[0].mxu0 %v253
    %v630 = vpop.f32.mrb[0].mxu0
    %v631 = vadd.f32 0.0, %v630
    %v632 = vpop.f32.mrb[0].mxu0
    %633 = vmatprep.mubr.f32.mxu0 0.0
    %634 = vmatmul.mubr.f32.gmra.mrb[0].mxu0 %v256
    %v635 = vpop.f32.mrb[0].mxu0
    %v636 = vadd.f32 0.0, %v635
    %v637 = vpop.f32.mrb[0].mxu0
    %638 = vmatprep.mubr.f32.mxu0 0.0
    %639 = vmatmul.mubr.f32.gmra.mrb[0].mxu0 %v259
    %v640 = vpop.f32.mrb[0].mxu0
    %v641 = vadd.f32 0.0, %v640
    %v642 = vpop.f32.mrb[0].mxu0
    %643 = vmatprep.mubr.f32.mxu0 0.0
    %644 = vmatmul.mubr.f32.gmra.mrb[0].mxu0 %v262
    %v645 = vpop.f32.mrb[0].mxu0
    %v646 = vadd.f32 0.0, %v645
    %v647 = vpop.f32.mrb[0].mxu0
    %648 = vmatprep.mubr.f32.mxu0 0.0
    %649 = vmatmul.mubr.f32.gmra.mrb[0].mxu0 %v265
    %v650 = vpop.f32.mrb[0].mxu0
    %v651 = vadd.f32 0.0, %v650
    %v652 = vpop.f32.mrb[0].mxu0
    %653 = vmatprep.mubr.f32.mxu0 0.0
    %654 = vmatmul.mubr.f32.gmra.mrb[0].mxu0 %v268
    %v655 = vpop.f32.mrb[0].mxu0
    %v656 = vadd.f32 0.0, %v655
    %v657 = vpop.f32.mrb[0].mxu0
    %658 = vdwg.mxu0
    %vm659 = vcmask 261120
    %v660 = vsel %vm659, %v341, 0.0
    %v661 = vsel %vm659, %v346, 0.0
    %v662 = vadd.f32 %v660, %v661
    %v663 = vsel %vm659, %v351, 0.0
    %v664 = vadd.f32 %v662, %v663
    %v665 = vsel %vm659, %v356, 0.0
    %v666 = vadd.f32 %v664, %v665
    %v667 = vsel %vm659, %v361, 0.0
    %v668 = vadd.f32 %v666, %v667
    %v669 = vsel %vm659, %v366, 0.0
    %v670 = vadd.f32 %v668, %v669
    %v671 = vsel %vm659, %v371, 0.0
    %v672 = vadd.f32 %v670, %v671
    %v673 = vsel %vm659, %v376, 0.0
    %v674 = vadd.f32 %v672, %v673
    %v675 = vsel %vm659, %v381, 0.0
    %v676 = vadd.f32 %v674, %v675
    %v677 = vsel %vm659, %v386, 0.0
    %v678 = vadd.f32 %v676, %v677
    %v679 = vsel %vm659, %v391, 0.0
    %v680 = vadd.f32 %v678, %v679
    %v681 = vsel %vm659, %v396, 0.0
    %v682 = vadd.f32 %v680, %v681
    %v683 = vsel %vm659, %v401, 0.0
    %v684 = vadd.f32 %v682, %v683
    %v685 = vsel %vm659, %v406, 0.0
    %v686 = vadd.f32 %v684, %v685
    %v687 = vsel %vm659, %v411, 0.0
    %v688 = vadd.f32 %v686, %v687
    %v689 = vsel %vm659, %v416, 0.0
    %v690 = vadd.f32 %v688, %v689
    %v691 = vsel %vm659, %v421, 0.0
    %v692 = vadd.f32 %v690, %v691
    %v693 = vsel %vm659, %v426, 0.0
    %v694 = vadd.f32 %v692, %v693
    %v695 = vsel %vm659, %v431, 0.0
    %v696 = vadd.f32 %v694, %v695
    %v697 = vsel %vm659, %v436, 0.0
    %v698 = vadd.f32 %v696, %v697
    %v699 = vsel %vm659, %v441, 0.0
    %v700 = vadd.f32 %v698, %v699
    %v701 = vsel %vm659, %v446, 0.0
    %v702 = vadd.f32 %v700, %v701
    %v703 = vsel %vm659, %v451, 0.0
    %v704 = vadd.f32 %v702, %v703
    %v705 = vsel %vm659, %v456, 0.0
    %v706 = vadd.f32 %v704, %v705
    %v707 = vsel %vm659, %v461, 0.0
    %v708 = vadd.f32 %v706, %v707
    %v709 = vsel %vm659, %v466, 0.0
    %v710 = vadd.f32 %v708, %v709
    %v711 = vsel %vm659, %v471, 0.0
    %v712 = vadd.f32 %v710, %v711
    %v713 = vsel %vm659, %v476, 0.0
    %v714 = vadd.f32 %v712, %v713
    %v715 = vsel %vm659, %v481, 0.0
    %v716 = vadd.f32 %v714, %v715
    %v717 = vsel %vm659, %v486, 0.0
    %v718 = vadd.f32 %v716, %v717
    %v719 = vsel %vm659, %v491, 0.0
    %v720 = vadd.f32 %v718, %v719
    %v721 = vsel %vm659, %v496, 0.0
    %v722 = vadd.f32 %v720, %v721
    %v723 = vsel %vm659, %v501, 0.0
    %v724 = vadd.f32 %v722, %v723
    %v725 = vsel %vm659, %v506, 0.0
    %v726 = vadd.f32 %v724, %v725
    %v727 = vsel %vm659, %v511, 0.0
    %v728 = vadd.f32 %v726, %v727
    %v729 = vsel %vm659, %v516, 0.0
    %v730 = vadd.f32 %v728, %v729
    %v731 = vsel %vm659, %v521, 0.0
    %v732 = vadd.f32 %v730, %v731
    %v733 = vsel %vm659, %v526, 0.0
    %v734 = vadd.f32 %v732, %v733
    %v735 = vsel %vm659, %v531, 0.0
    %v736 = vadd.f32 %v734, %v735
    %v737 = vsel %vm659, %v536, 0.0
    %v738 = vadd.f32 %v736, %v737
    %v739 = vsel %vm659, %v541, 0.0
    %v740 = vadd.f32 %v738, %v739
    %v741 = vsel %vm659, %v546, 0.0
    %v742 = vadd.f32 %v740, %v741
    %v743 = vsel %vm659, %v551, 0.0
    %v744 = vadd.f32 %v742, %v743
    %v745 = vsel %vm659, %v556, 0.0
    %v746 = vadd.f32 %v744, %v745
    %v747 = vsel %vm659, %v561, 0.0
    %v748 = vadd.f32 %v746, %v747
    %v749 = vsel %vm659, %v566, 0.0
    %v750 = vadd.f32 %v748, %v749
    %v751 = vsel %vm659, %v571, 0.0
    %v752 = vadd.f32 %v750, %v751
    %v753 = vsel %vm659, %v576, 0.0
    %v754 = vadd.f32 %v752, %v753
    %v755 = vsel %vm659, %v581, 0.0
    %v756 = vadd.f32 %v754, %v755
    %v757 = vsel %vm659, %v586, 0.0
    %v758 = vadd.f32 %v756, %v757
    %v759 = vsel %vm659, %v591, 0.0
    %v760 = vadd.f32 %v758, %v759
    %v761 = vsel %vm659, %v596, 0.0
    %v762 = vadd.f32 %v760, %v761
    %v763 = vsel %vm659, %v601, 0.0
    %v764 = vadd.f32 %v762, %v763
    %v765 = vsel %vm659, %v606, 0.0
    %v766 = vadd.f32 %v764, %v765
    %v767 = vsel %vm659, %v611, 0.0
    %v768 = vadd.f32 %v766, %v767
    %v769 = vsel %vm659, %v616, 0.0
    %v770 = vadd.f32 %v768, %v769
    %v771 = vsel %vm659, %v621, 0.0
    %v772 = vadd.f32 %v770, %v771
    %v773 = vsel %vm659, %v626, 0.0
    %v774 = vadd.f32 %v772, %v773
    %v775 = vsel %vm659, %v631, 0.0
    %v776 = vadd.f32 %v774, %v775
    %v777 = vsel %vm659, %v636, 0.0
    %v778 = vadd.f32 %v776, %v777
    %v779 = vsel %vm659, %v641, 0.0
    %v780 = vadd.f32 %v778, %v779
    %v781 = vsel %vm659, %v646, 0.0
    %v782 = vadd.f32 %v780, %v781
    %v783 = vsel %vm659, %v651, 0.0
    %v784 = vadd.f32 %v782, %v783
    %v785 = vsel %vm659, %v656, 0.0
    %v786 = vadd.f32 %v784, %v785
    %v787 = vrot.slane %v786, 4
    %v788 = vadd.f32 %v786, %v787
    %v789 = vrot.slane %v788, 2
    %v790 = vadd.f32 %v788, %v789
    %v791 = vrot.slane %v790, 1
    %v792 = vadd.f32 %v790, %v791
    %v793 = vmul.f32 %v341, %v341
    %v794 = vmul.f32 %v346, %v346
    %v795 = vmul.f32 %v351, %v351
    %v796 = vmul.f32 %v356, %v356
    %v797 = vmul.f32 %v361, %v361
    %v798 = vmul.f32 %v366, %v366
    %v799 = vmul.f32 %v371, %v371
    %v800 = vmul.f32 %v376, %v376
    %v801 = vmul.f32 %v381, %v381
    %v802 = vmul.f32 %v386, %v386
    %v803 = vmul.f32 %v391, %v391
    %v804 = vmul.f32 %v396, %v396
    %v805 = vmul.f32 %v401, %v401
    %v806 = vmul.f32 %v406, %v406
    %v807 = vmul.f32 %v411, %v411
    %v808 = vmul.f32 %v416, %v416
    %v809 = vmul.f32 %v421, %v421
    %v810 = vmul.f32 %v426, %v426
    %v811 = vmul.f32 %v431, %v431
    %v812 = vmul.f32 %v436, %v436
    %v813 = vmul.f32 %v441, %v441
    %v814 = vmul.f32 %v446, %v446
    %v815 = vmul.f32 %v451, %v451
    %v816 = vmul.f32 %v456, %v456
    %v817 = vmul.f32 %v461, %v461
    %v818 = vmul.f32 %v466, %v466
    %v819 = vmul.f32 %v471, %v471
    %v820 = vmul.f32 %v476, %v476
    %v821 = vmul.f32 %v481, %v481
    %v822 = vmul.f32 %v486, %v486
    %v823 = vmul.f32 %v491, %v491
    %v824 = vmul.f32 %v496, %v496
    %v825 = vmul.f32 %v501, %v501
    %v826 = vmul.f32 %v506, %v506
    %v827 = vmul.f32 %v511, %v511
    %v828 = vmul.f32 %v516, %v516
    %v829 = vmul.f32 %v521, %v521
    %v830 = vmul.f32 %v526, %v526
    %v831 = vmul.f32 %v531, %v531
    %v832 = vmul.f32 %v536, %v536
    %v833 = vmul.f32 %v541, %v541
    %v834 = vmul.f32 %v546, %v546
    %v835 = vmul.f32 %v551, %v551
    %v836 = vmul.f32 %v556, %v556
    %v837 = vmul.f32 %v561, %v561
    %v838 = vmul.f32 %v566, %v566
    %v839 = vmul.f32 %v571, %v571
    %v840 = vmul.f32 %v576, %v576
    %v841 = vmul.f32 %v581, %v581
    %v842 = vmul.f32 %v586, %v586
    %v843 = vmul.f32 %v591, %v591
    %v844 = vmul.f32 %v596, %v596
    %v845 = vmul.f32 %v601, %v601
    %v846 = vmul.f32 %v606, %v606
    %v847 = vmul.f32 %v611, %v611
    %v848 = vmul.f32 %v616, %v616
    %v849 = vmul.f32 %v621, %v621
    %v850 = vmul.f32 %v626, %v626
    %v851 = vmul.f32 %v631, %v631
    %v852 = vmul.f32 %v636, %v636
    %v853 = vmul.f32 %v641, %v641
    %v854 = vmul.f32 %v646, %v646
    %v855 = vmul.f32 %v651, %v651
    %v856 = vmul.f32 %v656, %v656
    %v857 = vsel %vm659, %v793, 0.0
    %v858 = vsel %vm659, %v794, 0.0
    %v859 = vadd.f32 %v857, %v858
    %v860 = vsel %vm659, %v795, 0.0
    %v861 = vadd.f32 %v859, %v860
    %v862 = vsel %vm659, %v796, 0.0
    %v863 = vadd.f32 %v861, %v862
    %v864 = vsel %vm659, %v797, 0.0
    %v865 = vadd.f32 %v863, %v864
    %v866 = vsel %vm659, %v798, 0.0
    %v867 = vadd.f32 %v865, %v866
    %v868 = vsel %vm659, %v799, 0.0
    %v869 = vadd.f32 %v867, %v868
    %v870 = vsel %vm659, %v800, 0.0
    %v871 = vadd.f32 %v869, %v870
    %v872 = vsel %vm659, %v801, 0.0
    %v873 = vadd.f32 %v871, %v872
    %v874 = vsel %vm659, %v802, 0.0
    %v875 = vadd.f32 %v873, %v874
    %v876 = vsel %vm659, %v803, 0.0
    %v877 = vadd.f32 %v875, %v876
    %v878 = vsel %vm659, %v804, 0.0
    %v879 = vadd.f32 %v877, %v878
    %v880 = vsel %vm659, %v805, 0.0
    %v881 = vadd.f32 %v879, %v880
    %v882 = vsel %vm659, %v806, 0.0
    %v883 = vadd.f32 %v881, %v882
    %v884 = vsel %vm659, %v807, 0.0
    %v885 = vadd.f32 %v883, %v884
    %v886 = vsel %vm659, %v808, 0.0
    %v887 = vadd.f32 %v885, %v886
    %v888 = vsel %vm659, %v809, 0.0
    %v889 = vadd.f32 %v887, %v888
    %v890 = vsel %vm659, %v810, 0.0
    %v891 = vadd.f32 %v889, %v890
    %v892 = vsel %vm659, %v811, 0.0
    %v893 = vadd.f32 %v891, %v892
    %v894 = vsel %vm659, %v812, 0.0
    %v895 = vadd.f32 %v893, %v894
    %v896 = vsel %vm659, %v813, 0.0
    %v897 = vadd.f32 %v895, %v896
    %v898 = vsel %vm659, %v814, 0.0
    %v899 = vadd.f32 %v897, %v898
    %v900 = vsel %vm659, %v815, 0.0
    %v901 = vadd.f32 %v899, %v900
    %v902 = vsel %vm659, %v816, 0.0
    %v903 = vadd.f32 %v901, %v902
    %v904 = vsel %vm659, %v817, 0.0
    %v905 = vadd.f32 %v903, %v904
    %v906 = vsel %vm659, %v818, 0.0
    %v907 = vadd.f32 %v905, %v906
    %v908 = vsel %vm659, %v819, 0.0
    %v909 = vadd.f32 %v907, %v908
    %v910 = vsel %vm659, %v820, 0.0
    %v911 = vadd.f32 %v909, %v910
    %v912 = vsel %vm659, %v821, 0.0
    %v913 = vadd.f32 %v911, %v912
    %v914 = vsel %vm659, %v822, 0.0
    %v915 = vadd.f32 %v913, %v914
    %v916 = vsel %vm659, %v823, 0.0
    %v917 = vadd.f32 %v915, %v916
    %v918 = vsel %vm659, %v824, 0.0
    %v919 = vadd.f32 %v917, %v918
    %v920 = vsel %vm659, %v825, 0.0
    %v921 = vadd.f32 %v919, %v920
    %v922 = vsel %vm659, %v826, 0.0
    %v923 = vadd.f32 %v921, %v922
    %v924 = vsel %vm659, %v827, 0.0
    %v925 = vadd.f32 %v923, %v924
    %v926 = vsel %vm659, %v828, 0.0
    %v927 = vadd.f32 %v925, %v926
    %v928 = vsel %vm659, %v829, 0.0
    %v929 = vadd.f32 %v927, %v928
    %v930 = vsel %vm659, %v830, 0.0
    %v931 = vadd.f32 %v929, %v930
    %v932 = vsel %vm659, %v831, 0.0
    %v933 = vadd.f32 %v931, %v932
    %v934 = vsel %vm659, %v832, 0.0
    %v935 = vadd.f32 %v933, %v934
    %v936 = vsel %vm659, %v833, 0.0
    %v937 = vadd.f32 %v935, %v936
    %v938 = vsel %vm659, %v834, 0.0
    %v939 = vadd.f32 %v937, %v938
    %v940 = vsel %vm659, %v835, 0.0
    %v941 = vadd.f32 %v939, %v940
    %v942 = vsel %vm659, %v836, 0.0
    %v943 = vadd.f32 %v941, %v942
    %v944 = vsel %vm659, %v837, 0.0
    %v945 = vadd.f32 %v943, %v944
    %v946 = vsel %vm659, %v838, 0.0
    %v947 = vadd.f32 %v945, %v946
    %v948 = vsel %vm659, %v839, 0.0
    %v949 = vadd.f32 %v947, %v948
    %v950 = vsel %vm659, %v840, 0.0
    %v951 = vadd.f32 %v949, %v950
    %v952 = vsel %vm659, %v841, 0.0
    %v953 = vadd.f32 %v951, %v952
    %v954 = vsel %vm659, %v842, 0.0
    %v955 = vadd.f32 %v953, %v954
    %v956 = vsel %vm659, %v843, 0.0
    %v957 = vadd.f32 %v955, %v956
    %v958 = vsel %vm659, %v844, 0.0
    %v959 = vadd.f32 %v957, %v958
    %v960 = vsel %vm659, %v845, 0.0
    %v961 = vadd.f32 %v959, %v960
    %v962 = vsel %vm659, %v846, 0.0
    %v963 = vadd.f32 %v961, %v962
    %v964 = vsel %vm659, %v847, 0.0
    %v965 = vadd.f32 %v963, %v964
    %v966 = vsel %vm659, %v848, 0.0
    %v967 = vadd.f32 %v965, %v966
    %v968 = vsel %vm659, %v849, 0.0
    %v969 = vadd.f32 %v967, %v968
    %v970 = vsel %vm659, %v850, 0.0
    %v971 = vadd.f32 %v969, %v970
    %v972 = vsel %vm659, %v851, 0.0
    %v973 = vadd.f32 %v971, %v972
    %v974 = vsel %vm659, %v852, 0.0
    %v975 = vadd.f32 %v973, %v974
    %v976 = vsel %vm659, %v853, 0.0
    %v977 = vadd.f32 %v975, %v976
    %v978 = vsel %vm659, %v854, 0.0
    %v979 = vadd.f32 %v977, %v978
    %v980 = vsel %vm659, %v855, 0.0
    %v981 = vadd.f32 %v979, %v980
    %v982 = vsel %vm659, %v856, 0.0
    %v983 = vadd.f32 %v981, %v982
    %v984 = vrot.slane %v983, 4
    %v985 = vadd.f32 %v983, %v984
    %v986 = vrot.slane %v985, 2
    %v987 = vadd.f32 %v985, %v986
    %v988 = vrot.slane %v987, 1
    %v989 = vadd.f32 %v987, %v988
    %vm990 = vcmask 1040384
    %v991 = vsel %vm990, %v792, %v989
    %vm992 = vcmask 254976
    %993 = vst.msk [vmem:[#allocation2] sm:$0x3] %vm992, %v991
    // Predicated region
    $region10: #{tpu_custom_call.1} parent=1 // pred_check
      _
    $region11: #{tpu_custom_call.1} parent=1 // pred_check_branch
      %995 = sbr.rel (0) target = $region13
    $region12: #{tpu_custom_call.1} parent=1 // pred_region
      %s997 = ssub.s32 32, 32
      %998 = vsyncadd [#allocation3], %s997
      %s1000 = sshll.u32 [#allocation2], 4
      %s1001 = int_to_ptr.vmem [resolvable:$true] %s1000
      %1003 = dma.vmem_to_hbm [thread:$0]  %s1001, 32, %s2, [#allocation3]
    $region13: #{tpu_custom_call.1} parent=1 // pred_fallthru
      _
    // Predicated region
    $region14: #{tpu_custom_call.1} parent=1 // pred_check
      _
    $region15: #{tpu_custom_call.1} parent=1 // pred_check_branch
      %1005 = sbr.rel (0) target = $region17
    $region16: #{tpu_custom_call.1} parent=1 // pred_region
      %1006 = dma.done [#allocation3], 32
    $region17: #{tpu_custom_call.1} parent=1 // pred_fallthru
      _
    %1007 = vsyncpa [#allocation3], 1

</llo_original>
